<compile_context>
chip_gen: v7x
topology: tpu7x:2x2x1
jax: 0.10.0
libtpu: 0.0.40
codegen_flags: <defaults>
</compile_context>

<pallas_src>
import functools

import jax
import jax.numpy as jnp
from jax.experimental import pallas as pl
from jax.experimental.pallas import tpu as pltpu

_MIB = 1024 * 1024


def _round_up(n, m):
    return ((n + m - 1) // m) * m


def _sublane_tile(dtype):
    size = jnp.dtype(dtype).itemsize
    if size >= 4:
        return 8
    if size == 2:
        return 16
    return 32


def _vmem_capacity_bytes():
    try:
        return int(pltpu.get_tpu_info().vmem_capacity_bytes)
    except Exception:
        return 64 * _MIB  # conservative (v7x-sized) fallback


_VMEM_CAPACITY = _vmem_capacity_bytes()

_single_buffer_ok = None


def _single_buffer_supported():
    """One-time probe: is pipeline_mode=pl.Buffered(1) supported for
    grid-invariant operands?  (Avoids a try/except around the real kernel that
    could mask genuine compile/VMEM errors.)"""
    global _single_buffer_ok
    if _single_buffer_ok is None:
        try:
            spec = pl.BlockSpec((8, 128), lambda i: (0, 0),
                                pipeline_mode=pl.Buffered(buffer_count=1))

            def _probe(c_ref, o_ref):
                o_ref[...] = c_ref[...]

            out = pl.pallas_call(
                _probe,
                out_shape=jax.ShapeDtypeStruct((8, 128), jnp.float32),
                grid=(1,),
                in_specs=[spec],
                out_specs=pl.BlockSpec((8, 128), lambda i: (0, 0)),
            )(jnp.zeros((8, 128), jnp.float32))
            jax.block_until_ready(out)
            _single_buffer_ok = True
        except Exception:
            _single_buffer_ok = False
    return _single_buffer_ok


# --------------------------------------------------------------------------
# Kernel body: one batch tile, all three layers fused, weights resident.
# --------------------------------------------------------------------------
def _mlp_sat_kernel(x_ref, w1_ref, b1_ref, w2_ref, b2_ref, w3_ref, b3_ref,
                    o_ref, *, mm_dtype):
    # lin_1 + tanh : MXU matmul with f32 accumulation; bias add + tanh in f32
    x = x_ref[...].astype(mm_dtype)
    h = jnp.dot(x, w1_ref[...], preferred_element_type=jnp.float32)
    h = jnp.tanh(h + b1_ref[...])

    # residual: h = h + tanh(lin_2(h))
    t = jnp.dot(h.astype(mm_dtype), w2_ref[...], preferred_element_type=jnp.float32)
    h = h + jnp.tanh(t + b2_ref[...])

    # lin_3 (no activation)
    y = jnp.dot(h.astype(mm_dtype), w3_ref[...], preferred_element_type=jnp.float32)
    o_ref[...] = (y + b3_ref[...]).astype(o_ref.dtype)


# --------------------------------------------------------------------------
# One-time parameter preparation (hoisted out of the per-call hot path).
# --------------------------------------------------------------------------
def prepare_params(w1, b1, w2, b2, w3, b3, *, use_bf16_matmul=False):
    """Pad feature dims to multiples of 128 and cast weights to the MXU feed
    dtype ONCE.  w_i: (in, out) [already transposed vs PyTorch], b_i: (out,).
    Biases are kept in f32. Returns (padded_param_tuple, output_dim)."""
    input_dim, hidden_dim = w1.shape
    output_dim = w3.shape[1]
    mm_dtype = jnp.bfloat16 if use_bf16_matmul else w1.dtype

    in_p = _round_up(input_dim, 128)
    hid_p = _round_up(hidden_dim, 128)
    out_p = _round_up(output_dim, 128)

    w1_p = jnp.pad(w1.astype(mm_dtype), ((0, in_p - input_dim), (0, hid_p - hidden_dim)))
    w2_p = jnp.pad(w2.astype(mm_dtype), ((0, hid_p - hidden_dim), (0, hid_p - hidden_dim)))
    w3_p = jnp.pad(w3.astype(mm_dtype), ((0, hid_p - hidden_dim), (0, out_p - output_dim)))
    b1_p = jnp.pad(b1.astype(jnp.float32), (0, hid_p - hidden_dim)).reshape(1, hid_p)
    b2_p = jnp.pad(b2.astype(jnp.float32), (0, hid_p - hidden_dim)).reshape(1, hid_p)
    b3_p = jnp.pad(b3.astype(jnp.float32), (0, out_p - output_dim)).reshape(1, out_p)

    return (w1_p, b1_p, w2_p, b2_p, w3_p, b3_p), output_dim


# --------------------------------------------------------------------------
# Wrapper: batch-tiled grid, lane-dense 128-padded features.
# --------------------------------------------------------------------------
def mlp_sat(x, params, output_dim, *, tile_b=None):
    """x: (B, input_dim); params: output of prepare_params (pre-padded).
    Returns (B, output_dim)."""
    w1_p, b1_p, w2_p, b2_p, w3_p, b3_p = params
    B, input_dim = x.shape
    in_p, hid_p = w1_p.shape
    out_p = w3_p.shape[1]
    mm_dtype = w1_p.dtype
    out_dtype = x.dtype
    itemsize = jnp.dtype(out_dtype).itemsize
    mm_itemsize = jnp.dtype(mm_dtype).itemsize
    sub = _sublane_tile(out_dtype)

    single_buf = _single_buffer_supported()
    weight_buffers = 1 if single_buf else 2

    # resident weight/bias bytes (biases are f32)
    w_bytes = ((in_p * hid_p + hid_p * hid_p + hid_p * out_p) * mm_itemsize
               + (2 * hid_p + out_p) * 4) * weight_buffers

    # chip-aware VMEM budget (~72% of physical capacity: ~92 MiB v5e/v6e, ~46 MiB v7x)
    budget = int(0.72 * _VMEM_CAPACITY)

    def vmem_need(tb):
        io = 2 * tb * (in_p + out_p) * itemsize   # double-buffered x / out tiles
        act = 3 * tb * hid_p * 4                  # f32 intermediates (h, t, acc)
        act += tb * hid_p * mm_itemsize           # matmul-feed copy of h
        return int((w_bytes + io + act) * 1.10)   # ~10% Mosaic internal-scratch headroom

    if vmem_need(sub) > budget:
        # TODO(synk): K-block the hidden dimension (emit_pipeline over hid_p chunks)
        # for weight matrices that do not fit VMEM; for now fail loudly.
        raise ValueError(
            f"MLP_sat weights ({w_bytes / _MIB:.1f} MiB resident) do not fit the VMEM "
            f"budget ({budget / _MIB:.1f} MiB); hidden_dim={hid_p} is too large for the "
            "fully-fused single-pass kernel.")

    if tile_b is None:
        # start big on big-VMEM chips (v5e/v6e), smaller on v7x
        tile_b = 2048 if budget >= 80 * _MIB else (1024 if budget >= 48 * _MIB else 512)
        while tile_b > sub and vmem_need(tile_b) > budget:
            tile_b //= 2
        tile_b = max(_round_up(tile_b, sub), sub)
        # megacore (v7x has 2 TensorCores): keep >= 2 grid steps whenever batch allows
        if B >= 2 * sub:
            tile_b = min(tile_b, _round_up(-(-B // 2), sub))
        else:
            tile_b = min(tile_b, _round_up(B, sub))
    tile_b = max(_round_up(tile_b, sub), sub)

    B_p = _round_up(B, tile_b)
    grid = (B_p // tile_b,)

    # only x is padded per call (weights/biases were pre-padded in prepare_params)
    x_p = jnp.pad(x, ((0, B_p - B), (0, in_p - input_dim)))

    cost = pl.CostEstimate(
        flops=2 * B_p * (in_p * hid_p + hid_p * hid_p + hid_p * out_p),
        transcendentals=2 * B_p * hid_p,
        bytes_accessed=B_p * (in_p + out_p) * itemsize + w_bytes,
    )

    vmem_limit = int(min(max(int(1.25 * vmem_need(tile_b)), 32 * _MIB),
                         int(0.95 * _VMEM_CAPACITY)))

    def const_spec(shape):
        # grid-invariant operand: single buffer saves VMEM when supported
        if single_buf:
            return pl.BlockSpec(shape, lambda i: (0, 0),
                                pipeline_mode=pl.Buffered(buffer_count=1))
        return pl.BlockSpec(shape, lambda i: (0, 0))

    kernel = functools.partial(_mlp_sat_kernel, mm_dtype=mm_dtype)

    y_p = pl.pallas_call(
        kernel,
        out_shape=jax.ShapeDtypeStruct((B_p, out_p), out_dtype),
        grid_spec=pltpu.PrefetchScalarGridSpec(
            num_scalar_prefetch=0,
            grid=grid,
            in_specs=[
                pl.BlockSpec((tile_b, in_p), lambda i: (i, 0)),   # x tile (pipelined)
                const_spec((in_p, hid_p)),                        # W1
                const_spec((1, hid_p)),                           # b1
                const_spec((hid_p, hid_p)),                       # W2
                const_spec((1, hid_p)),                           # b2
                const_spec((hid_p, out_p)),                       # W3
                const_spec((1, out_p)),                           # b3
            ],
            out_specs=pl.BlockSpec((tile_b, out_p), lambda i: (i, 0)),
        ),
        compiler_params=pltpu.CompilerParams(
            dimension_semantics=("parallel",),
            vmem_limit_bytes=vmem_limit,
        ),
        cost_estimate=cost,
    )(x_p, w1_p, b1_p, w2_p, b2_p, w3_p, b3_p)

    return y_p[:B, :output_dim]


# --------------------------------------------------------------------------
# Init / reference
# --------------------------------------------------------------------------
def init_params(key, input_dim, hidden_dim, output_dim, dtype=jnp.float32):
    """Mimics nn.Linear default init (uniform +/- 1/sqrt(fan_in)).
    Weights stored as (in_dim, out_dim), i.e. already transposed vs PyTorch."""
    ks = jax.random.split(key, 6)

    def lin(kw, kb, fan_in, fan_out):
        bound = 1.0 / (fan_in ** 0.5)
        w = jax.random.uniform(kw, (fan_in, fan_out), dtype, -bound, bound)
        b = jax.random.uniform(kb, (fan_out,), dtype, -bound, bound)
        return w, b

    w1, b1 = lin(ks[0], ks[1], input_dim, hidden_dim)
    w2, b2 = lin(ks[2], ks[3], hidden_dim, hidden_dim)
    w3, b3 = lin(ks[4], ks[5], hidden_dim, output_dim)
    return w1, b1, w2, b2, w3, b3


def mlp_sat_ref(x, w1, b1, w2, b2, w3, b3):
    h = jnp.tanh(x @ w1 + b1)
    h = h + jnp.tanh(h @ w2 + b2)
    return h @ w3 + b3


if __name__ == "__main__":
    input_dim, hidden_dim, output_dim = 16, 32, 8
    batch = 64

    key = jax.random.PRNGKey(0)
    kx, kp = jax.random.split(key)
    x = jax.random.normal(kx, (batch, input_dim), jnp.float32)
    raw = init_params(kp, input_dim, hidden_dim, output_dim)

    # pad/cast weights ONCE (hoisted out of the per-call hot path)
    params, out_dim = prepare_params(*raw)
    y = jax.block_until_ready(mlp_sat(x, params, out_dim))

    y_ref = mlp_sat_ref(x, *raw)
    assert y.shape == (batch, output_dim), y.shape
    assert jnp.allclose(y, y_ref, atol=1e-5, rtol=1e-5), "mismatch vs reference"

    # optional bf16 MXU-feed mode (explicit speed/numerics tradeoff)
    params_bf16, _ = prepare_params(*raw, use_bf16_matmul=True)
    y_bf16 = jax.block_until_ready(mlp_sat(x, params_bf16, out_dim))
    assert y_bf16.shape == (batch, output_dim)
    assert jnp.allclose(y_bf16, y_ref, atol=5e-2, rtol=5e-2), "bf16 feed mismatch"

    print("KERNEL_OK")
</pallas_src>

<mosaic_0001>
module attributes {stable_mosaic.version = 11 : i64} {
  func.func @_probe(%arg0: i32, %arg1: memref<8x128xf32, #tpu.memory_space<vmem>>, %arg2: memref<8x128xf32, #tpu.memory_space<vmem>>) attributes {dimension_semantics = [#tpu.dimension_semantics<arbitrary>], iteration_bounds = array<i64: 1>, scalar_prefetch = 0 : i64, scratch_operands = 0 : i64, tpu.core_type = #tpu.core_type<tc>, window_params = [{pipeline_mode = #tpu.pipeline_mode<synchronous>, transform_indices = @transform_0, window_bounds = array<i64: 8, 128>}, {pipeline_mode = #tpu.pipeline_mode<synchronous>, transform_indices = @transform_1, window_bounds = array<i64: 8, 128>}]} {
    %c0 = arith.constant 0 : index
    %c0_0 = arith.constant 0 : index
    %0 = vector.load %arg1[%c0, %c0_0] : memref<8x128xf32, #tpu.memory_space<vmem>>, vector<8x128xf32>
    %c0_1 = arith.constant 0 : index
    %c0_2 = arith.constant 0 : index
    %1 = vector.load %arg2[%c0_1, %c0_2] : memref<8x128xf32, #tpu.memory_space<vmem>>, vector<8x128xf32>
    tpu.vector_store %arg2[%c0_1, %c0_2], %0 {strides = array<i32>} : memref<8x128xf32, #tpu.memory_space<vmem>>, vector<8x128xf32>,
    return
  }
  func.func @transform_0(%arg0: i32) -> (i32, i32) {
    %c0_i32 = arith.constant 0 : i32
    %c0_i32_0 = arith.constant 0 : i32
    %c0_i32_1 = arith.constant 0 : i32
    return %c0_i32, %c0_i32_0 : i32, i32
  }
  func.func @transform_1(%arg0: i32) -> (i32, i32) {
    %c0_i32 = arith.constant 0 : i32
    %c0_i32_0 = arith.constant 0 : i32
    %c0_i32_1 = arith.constant 0 : i32
    return %c0_i32, %c0_i32_0 : i32, i32
  }
}

module attributes {stable_mosaic.version = 11 : i64} {
  func.func @_mlp_sat_kernel(%arg0: i32, %arg1: memref<32x128xf32, #tpu.memory_space<vmem>>, %arg2: memref<128x128xf32, #tpu.memory_space<vmem>>, %arg3: memref<1x128xf32, #tpu.memory_space<vmem>>, %arg4: memref<128x128xf32, #tpu.memory_space<vmem>>, %arg5: memref<1x128xf32, #tpu.memory_space<vmem>>, %arg6: memref<128x128xf32, #tpu.memory_space<vmem>>, %arg7: memref<1x128xf32, #tpu.memory_space<vmem>>, %arg8: memref<32x128xf32, #tpu.memory_space<vmem>>) attributes {dimension_semantics = [#tpu.dimension_semantics<parallel>], iteration_bounds = array<i64: 2>, scalar_prefetch = 0 : i64, scratch_operands = 0 : i64, tpu.core_type = #tpu.core_type<tc>, window_params = [{transform_indices = @transform_0, window_bounds = array<i64: 32, 128>}, {pipeline_mode = #tpu.pipeline_mode<synchronous>, transform_indices = @transform_1, window_bounds = array<i64: 128, 128>}, {pipeline_mode = #tpu.pipeline_mode<synchronous>, transform_indices = @transform_2, window_bounds = array<i64: 1, 128>}, {pipeline_mode = #tpu.pipeline_mode<synchronous>, transform_indices = @transform_3, window_bounds = array<i64: 128, 128>}, {pipeline_mode = #tpu.pipeline_mode<synchronous>, transform_indices = @transform_4, window_bounds = array<i64: 1, 128>}, {pipeline_mode = #tpu.pipeline_mode<synchronous>, transform_indices = @transform_5, window_bounds = array<i64: 128, 128>}, {pipeline_mode = #tpu.pipeline_mode<synchronous>, transform_indices = @transform_6, window_bounds = array<i64: 1, 128>}, {transform_indices = @transform_7, window_bounds = array<i64: 32, 128>}]} {
    %c0 = arith.constant 0 : index
    %c0_0 = arith.constant 0 : index
    %0 = vector.load %arg1[%c0, %c0_0] : memref<32x128xf32, #tpu.memory_space<vmem>>, vector<32x128xf32>
    %c0_1 = arith.constant 0 : index
    %c0_2 = arith.constant 0 : index
    %1 = vector.load %arg2[%c0_1, %c0_2] : memref<128x128xf32, #tpu.memory_space<vmem>>, vector<128x128xf32>
    %cst = arith.constant dense<0.000000e+00> : vector<32x128xf32>
    %2 = tpu.matmul %0, %1, %cst {dimension_numbers = #tpu.dot_dimension_numbers<[1], [0], [0], [1], [0, 0, 1, 1], [], []>} : vector<32x128xf32>, vector<128x128xf32>, vector<32x128xf32> -> vector<32x128xf32>
    %c0_3 = arith.constant 0 : index
    %c0_4 = arith.constant 0 : index
    %3 = vector.load %arg3[%c0_3, %c0_4] : memref<1x128xf32, #tpu.memory_space<vmem>>, vector<1x128xf32>
    %4 = vector.broadcast %3 : vector<1x128xf32> to vector<32x128xf32>
    %5 = arith.addf %2, %4 : vector<32x128xf32>
    %6 = math.tanh %5 : vector<32x128xf32>
    %c0_5 = arith.constant 0 : index
    %c0_6 = arith.constant 0 : index
    %7 = vector.load %arg4[%c0_5, %c0_6] : memref<128x128xf32, #tpu.memory_space<vmem>>, vector<128x128xf32>
    %cst_7 = arith.constant dense<0.000000e+00> : vector<32x128xf32>
    %8 = tpu.matmul %6, %7, %cst_7 {dimension_numbers = #tpu.dot_dimension_numbers<[1], [0], [0], [1], [0, 0, 1, 1], [], []>} : vector<32x128xf32>, vector<128x128xf32>, vector<32x128xf32> -> vector<32x128xf32>
    %c0_8 = arith.constant 0 : index
    %c0_9 = arith.constant 0 : index
    %9 = vector.load %arg5[%c0_8, %c0_9] : memref<1x128xf32, #tpu.memory_space<vmem>>, vector<1x128xf32>
    %10 = vector.broadcast %9 : vector<1x128xf32> to vector<32x128xf32>
    %11 = arith.addf %8, %10 : vector<32x128xf32>
    %12 = math.tanh %11 : vector<32x128xf32>
    %13 = arith.addf %6, %12 : vector<32x128xf32>
    %c0_10 = arith.constant 0 : index
    %c0_11 = arith.constant 0 : index
    %14 = vector.load %arg6[%c0_10, %c0_11] : memref<128x128xf32, #tpu.memory_space<vmem>>, vector<128x128xf32>
    %cst_12 = arith.constant dense<0.000000e+00> : vector<32x128xf32>
    %15 = tpu.matmul %13, %14, %cst_12 {dimension_numbers = #tpu.dot_dimension_numbers<[1], [0], [0], [1], [0, 0, 1, 1], [], []>} : vector<32x128xf32>, vector<128x128xf32>, vector<32x128xf32> -> vector<32x128xf32>
    %c0_13 = arith.constant 0 : index
    %c0_14 = arith.constant 0 : index
    %16 = vector.load %arg7[%c0_13, %c0_14] : memref<1x128xf32, #tpu.memory_space<vmem>>, vector<1x128xf32>
    %17 = vector.broadcast %16 : vector<1x128xf32> to vector<32x128xf32>
    %18 = arith.addf %15, %17 : vector<32x128xf32>
    %c0_15 = arith.constant 0 : index
    %c0_16 = arith.constant 0 : index
    %19 = vector.load %arg8[%c0_15, %c0_16] : memref<32x128xf32, #tpu.memory_space<vmem>>, vector<32x128xf32>
    tpu.vector_store %arg8[%c0_15, %c0_16], %18 {strides = array<i32>} : memref<32x128xf32, #tpu.memory_space<vmem>>, vector<32x128xf32>,
    return
  }
  func.func @transform_0(%arg0: i32) -> (i32, i32) {
    %c0_i32 = arith.constant 0 : i32
    %c0_i32_0 = arith.constant 0 : i32
    return %arg0, %c0_i32 : i32, i32
  }
  func.func @transform_1(%arg0: i32) -> (i32, i32) {
    %c0_i32 = arith.constant 0 : i32
    %c0_i32_0 = arith.constant 0 : i32
    %c0_i32_1 = arith.constant 0 : i32
    return %c0_i32, %c0_i32_0 : i32, i32
  }
  func.func @transform_2(%arg0: i32) -> (i32, i32) {
    %c0_i32 = arith.constant 0 : i32
    %c0_i32_0 = arith.constant 0 : i32
    %c0_i32_1 = arith.constant 0 : i32
    return %c0_i32, %c0_i32_0 : i32, i32
  }
  func.func @transform_3(%arg0: i32) -> (i32, i32) {
    %c0_i32 = arith.constant 0 : i32
    %c0_i32_0 = arith.constant 0 : i32
    %c0_i32_1 = arith.constant 0 : i32
    return %c0_i32, %c0_i32_0 : i32, i32
  }
  func.func @transform_4(%arg0: i32) -> (i32, i32) {
    %c0_i32 = arith.constant 0 : i32
    %c0_i32_0 = arith.constant 0 : i32
    %c0_i32_1 = arith.constant 0 : i32
    return %c0_i32, %c0_i32_0 : i32, i32
  }
  func.func @transform_5(%arg0: i32) -> (i32, i32) {
    %c0_i32 = arith.constant 0 : i32
    %c0_i32_0 = arith.constant 0 : i32
    %c0_i32_1 = arith.constant 0 : i32
    return %c0_i32, %c0_i32_0 : i32, i32
  }
  func.func @transform_6(%arg0: i32) -> (i32, i32) {
    %c0_i32 = arith.constant 0 : i32
    %c0_i32_0 = arith.constant 0 : i32
    %c0_i32_1 = arith.constant 0 : i32
    return %c0_i32, %c0_i32_0 : i32, i32
  }
  func.func @transform_7(%arg0: i32) -> (i32, i32) {
    %c0_i32 = arith.constant 0 : i32
    %c0_i32_0 = arith.constant 0 : i32
    return %arg0, %c0_i32 : i32, i32
  }
}

</mosaic_0001>

<llo_original>
// kernel: tpu_custom_call.1
$region0: #{tpu_custom_call.1}
  #allocation0 [shape = 'u32[]', space=smem, size = 0x4, offset = 0x4, fixed_abs, tag = 'smem constant byte address 0x4 - core index']
  #allocation1 [shape = 'u32[144,128]{1,0:T(1,128)}', space=vmem, size = 0x12000, scoped, tag = 'internal scratch']
  %s0 = inlined_call_operand.hbm [shape: f32[8,128], index: 0, kind: input, shape index: {}]
  %s1 = inlined_call_operand.hbm [shape: f32[8,128], index: 1, kind: output, shape index: {}]
  %s2 = sld [smem:[#allocation0]]
  $region18: #{tpu_custom_call.1} parent=0
    _
  %s4 = ssub.s32 1, %s2
  %s5 = scalar_select 0, %s4, %s2
  $region1: #{tpu_custom_call.1} parent=0
    #allocation2 [shape = 'u8[4096]{0}', space=vmem, size = 0x1000, scoped, tag = 'input window, operand 0, single buffered']
    #allocation3 [shape = 's32[1]{0}', space=sflag, size = 0x4, scoped, tag = 'scoped memory for tpu_custom_call.1']
    #allocation4 [shape = 's32[1]{0}', space=sflag, size = 0x4, scoped, tag = 'scoped memory for tpu_custom_call.1']
    #allocation5 [shape = 'u8[4096]{0}', space=vmem, size = 0x1000, scoped, tag = 'output window, operand 0, single buffered']
    %6 = vsyncpa [#allocation3], 0
    %7 = vsyncpa [#allocation4], 0
    // Predicated region
    $region2: #{tpu_custom_call.1} parent=1 // pred_check
      _
    $region3: #{tpu_custom_call.1} parent=1 // pred_check_branch
      %9 = sbr.rel (0) target = $region5
    $region4: #{tpu_custom_call.1} parent=1 // pred_region
      %s11 = ssub.s32 128, 128
      %12 = vsyncadd [#allocation3], %s11
      %s14 = sshll.u32 [#allocation2], 4
      %s15 = int_to_ptr.vmem [resolvable:$true] %s14
      %17 = dma.hbm_to_vmem [thread:$0]  %s0, 128, %s15, [#allocation3]
    $region5: #{tpu_custom_call.1} parent=1 // pred_fallthru
      _
    // Predicated region
    $region6: #{tpu_custom_call.1} parent=1 // pred_check
      _
    $region7: #{tpu_custom_call.1} parent=1 // pred_check_branch
      %19 = sbr.rel (0) target = $region9
    $region8: #{tpu_custom_call.1} parent=1 // pred_region
      %20 = dma.done [#allocation3], 128
    $region9: #{tpu_custom_call.1} parent=1 // pred_fallthru
      _
    %v21 = vld [vmem:[#allocation2] sm:$0xff]
    %22 = vst [vmem:[#allocation5] sm:$0xff] %v21
    // Predicated region
    $region10: #{tpu_custom_call.1} parent=1 // pred_check
      _
    $region11: #{tpu_custom_call.1} parent=1 // pred_check_branch
      %24 = sbr.rel (0) target = $region13
    $region12: #{tpu_custom_call.1} parent=1 // pred_region
      %s26 = ssub.s32 128, 128
      %27 = vsyncadd [#allocation4], %s26
      %s29 = sshll.u32 [#allocation5], 4
      %s30 = int_to_ptr.vmem [resolvable:$true] %s29
      %32 = dma.vmem_to_hbm [thread:$0]  %s30, 128, %s1, [#allocation4]
    $region13: #{tpu_custom_call.1} parent=1 // pred_fallthru
      _
    // Predicated region
    $region14: #{tpu_custom_call.1} parent=1 // pred_check
      _
    $region15: #{tpu_custom_call.1} parent=1 // pred_check_branch
      %34 = sbr.rel (0) target = $region17
    $region16: #{tpu_custom_call.1} parent=1 // pred_region
      %35 = dma.done [#allocation4], 128
    $region17: #{tpu_custom_call.1} parent=1 // pred_fallthru
      _
    %36 = vsyncpa [#allocation3], 1
    %37 = vsyncpa [#allocation4], 1

// kernel: tpu_custom_call.1
$region0: #{tpu_custom_call.1}
  #allocation0 [shape = 'u32[]', space=smem, size = 0x4, offset = 0x4, fixed_abs, tag = 'smem constant byte address 0x4 - core index']
  #allocation1 [shape = 'u32[144,128]{1,0:T(1,128)}', space=vmem, size = 0x12000, scoped, tag = 'internal scratch']
  %s0 = inlined_call_operand.hbm [shape: f32[64,128], index: 0, kind: input, shape index: {}]
  %s1 = inlined_call_operand.hbm [shape: f32[128,128], index: 1, kind: input, shape index: {}]
  %s2 = inlined_call_operand.vmem [shape: f32[1,128], index: 2, kind: input, shape index: {}]
  %s3 = inlined_call_operand.hbm [shape: f32[128,128], index: 3, kind: input, shape index: {}]
  %s4 = inlined_call_operand.vmem [shape: f32[1,128], index: 4, kind: input, shape index: {}]
  %s5 = inlined_call_operand.hbm [shape: f32[128,128], index: 5, kind: input, shape index: {}]
  %s6 = inlined_call_operand.vmem [shape: f32[1,128], index: 6, kind: input, shape index: {}]
  %s7 = inlined_call_operand.hbm [shape: f32[64,128], index: 7, kind: output, shape index: {}]
  %s8 = sld [smem:[#allocation0]]
  $region77: #{tpu_custom_call.1} parent=0
    _
  %s10 = ssub.s32 1, %s8
  %s11 = scalar_select 0, %s10, %s8
  $region1: #{tpu_custom_call.1} parent=0
    #allocation2 [shape = 'u8[32768]{0}', space=vmem, size = 0x8000, scoped, tag = 'input window, operand 0']
    #allocation3 [shape = 's32[2]{0}', space=sflag, size = 0x8, scoped, tag = 'scoped memory for tpu_custom_call.1']
    #allocation4 [shape = 's32[2]{0}', space=sflag, size = 0x8, scoped, tag = 'scoped memory for tpu_custom_call.1']
    #allocation5 [shape = 'u8[65536]{0}', space=vmem, size = 0x10000, scoped, tag = 'input window, operand 1, single buffered']
    #allocation6 [shape = 's32[1]{0}', space=sflag, size = 0x4, scoped, tag = 'scoped memory for tpu_custom_call.1']
    #allocation7 [shape = 'u8[65536]{0}', space=vmem, size = 0x10000, scoped, tag = 'input window, operand 3, single buffered']
    #allocation8 [shape = 'u8[65536]{0}', space=vmem, size = 0x10000, scoped, tag = 'input window, operand 5, single buffered']
    #allocation9 [shape = 's32[1]{0}', space=sflag, size = 0x4, scoped, tag = 'scoped memory for tpu_custom_call.1']
    #allocation10 [shape = 'u8[32768]{0}', space=vmem, size = 0x8000, scoped, tag = 'output window, operand 0']
    %12 = vsyncpa [#allocation3], 0
    %s13 = scalar_lea.sflag [#allocation3], 1
    %14 = vsyncpa %s13, 0
    %15 = vsyncpa [#allocation6], 0
    %16 = vsyncpa [#allocation9], 0
    %17 = vsyncpa [#allocation4], 0
    %s18 = scalar_lea.sflag [#allocation4], 1
    %19 = vsyncpa %s18, 0
    loop: start=0, step=1, limit=4
    $region2: #{tpu_custom_call.1} parent=1 // loop_pre_header
      _
    $region3: #{tpu_custom_call.1} parent=1 // loop_header
      %s21 = sphi 0, %s25
      %p22 = scmp.ge.s32.totalorder %s21, 4
      %s31 = sphi 0, %s33
      %s34 = sphi 0, %s31
      %s35 = sphi 0, %s34
      %s51 = sphi 0, %s35
      %s55 = sphi 0, %s55
      %s57 = sphi 0, %s55
      %s58 = sphi 0, %s57
      %s72 = sphi 0, %s58
      %s76 = sphi 0, %s76
      %s78 = sphi 0, %s76
      %s79 = sphi 0, %s78
      %s93 = sphi 0, %s79
      %s97 = sphi 0, %s97
      %s99 = sphi 0, %s97
      %s100 = sphi 0, %s99
      %s114 = sphi 0, %s100
      %s118 = sphi 0, %s118
      %s120 = sphi 0, %s118
      %s121 = sphi 0, %s120
      %s135 = sphi 0, %s121
      %s139 = sphi 0, %s139
      %s141 = sphi 0, %s139
      %s142 = sphi 0, %s141
      %s156 = sphi 0, %s142
      %s160 = sphi 0, %s160
      %s162 = sphi 0, %s160
      %s163 = sphi 0, %s162
      %s177 = sphi 0, %s163
      %s183 = sphi 0, %s185
      %s186 = sphi 0, %s183
      %s187 = sphi 0, %s186
      %s203 = sphi 0, %s187
    $region4: #{tpu_custom_call.1} parent=1 // loop_header_branch
      %24 = sbr.rel (%p22) target = $region8
    $region5: #{tpu_custom_call.1} parent=1 // loop_body
      %s26 = ssub.s32 %s21, 1
      %s27 = ssub.s32 %s21, 2
      %s28 = sadd.s32 %s21, 1
      %s29 = ssub.s32 %s21, %s28
      %p30 = scmp.eq.s32.totalorder %s29, 0
      %s32 = sadd.s32 %s31, 1
      %s33 = scalar_select %p30, %s31, %s32
      %p36 = pneg %p30
      %p37 = scmp.eq.s32.totalorder %s21, 1
      %p38 = por %p36, %p37
      %p39 = scmp.ne.s32.totalorder %s31, %s34
      %p40 = scmp.eq.s32.totalorder %s21, 0
      %p41 = por %p39, %p40
      %p42 = scmp.ne.s32.totalorder %s31, %s34
      %p43 = scmp.eq.s32.totalorder %s26, 1
      %p44 = por %p42, %p43
      %p45 = scmp.ne.s32.totalorder %s34, %s35
      %p46 = scmp.eq.s32.totalorder %s26, 0
      %p47 = por %p45, %p46
      %p48 = scmp.ne.s32.totalorder %s34, %s35
      %p49 = scmp.eq.s32.totalorder %s27, 1
      %p50 = por %p48, %p49
      %p52 = scmp.ne.s32.totalorder %s35, %s51
      %p53 = scmp.eq.s32.totalorder %s27, 0
      %p54 = por %p52, %p53
      %s56 = sadd.s32 %s55, 1
      %p59 = scmp.eq.s32.totalorder %s21, 1
      %p60 = scmp.ne.s32.totalorder %s55, %s57
      %p61 = scmp.eq.s32.totalorder %s21, 0
      %p62 = por %p60, %p61
      %p63 = scmp.ne.s32.totalorder %s55, %s57
      %p64 = scmp.eq.s32.totalorder %s26, 1
      %p65 = por %p63, %p64
      %p66 = scmp.ne.s32.totalorder %s57, %s58
      %p67 = scmp.eq.s32.totalorder %s26, 0
      %p68 = por %p66, %p67
      %p69 = scmp.ne.s32.totalorder %s57, %s58
      %p70 = scmp.eq.s32.totalorder %s27, 1
      %p71 = por %p69, %p70
      %p73 = scmp.ne.s32.totalorder %s58, %s72
      %p74 = scmp.eq.s32.totalorder %s27, 0
      %p75 = por %p73, %p74
      %s77 = sadd.s32 %s76, 1
      %p80 = scmp.eq.s32.totalorder %s21, 1
      %p81 = scmp.ne.s32.totalorder %s76, %s78
      %p82 = scmp.eq.s32.totalorder %s21, 0
      %p83 = por %p81, %p82
      %p84 = scmp.ne.s32.totalorder %s76, %s78
      %p85 = scmp.eq.s32.totalorder %s26, 1
      %p86 = por %p84, %p85
      %p87 = scmp.ne.s32.totalorder %s78, %s79
      %p88 = scmp.eq.s32.totalorder %s26, 0
      %p89 = por %p87, %p88
      %p90 = scmp.ne.s32.totalorder %s78, %s79
      %p91 = scmp.eq.s32.totalorder %s27, 1
      %p92 = por %p90, %p91
      %p94 = scmp.ne.s32.totalorder %s79, %s93
      %p95 = scmp.eq.s32.totalorder %s27, 0
      %p96 = por %p94, %p95
      %s98 = sadd.s32 %s97, 1
      %p101 = scmp.eq.s32.totalorder %s21, 1
      %p102 = scmp.ne.s32.totalorder %s97, %s99
      %p103 = scmp.eq.s32.totalorder %s21, 0
      %p104 = por %p102, %p103
      %p105 = scmp.ne.s32.totalorder %s97, %s99
      %p106 = scmp.eq.s32.totalorder %s26, 1
      %p107 = por %p105, %p106
      %p108 = scmp.ne.s32.totalorder %s99, %s100
      %p109 = scmp.eq.s32.totalorder %s26, 0
      %p110 = por %p108, %p109
      %p111 = scmp.ne.s32.totalorder %s99, %s100
      %p112 = scmp.eq.s32.totalorder %s27, 1
      %p113 = por %p111, %p112
      %p115 = scmp.ne.s32.totalorder %s100, %s114
      %p116 = scmp.eq.s32.totalorder %s27, 0
      %p117 = por %p115, %p116
      %s119 = sadd.s32 %s118, 1
      %p122 = scmp.eq.s32.totalorder %s21, 1
      %p123 = scmp.ne.s32.totalorder %s118, %s120
      %p124 = scmp.eq.s32.totalorder %s21, 0
      %p125 = por %p123, %p124
      %p126 = scmp.ne.s32.totalorder %s118, %s120
      %p127 = scmp.eq.s32.totalorder %s26, 1
      %p128 = por %p126, %p127
      %p129 = scmp.ne.s32.totalorder %s120, %s121
      %p130 = scmp.eq.s32.totalorder %s26, 0
      %p131 = por %p129, %p130
      %p132 = scmp.ne.s32.totalorder %s120, %s121
      %p133 = scmp.eq.s32.totalorder %s27, 1
      %p134 = por %p132, %p133
      %p136 = scmp.ne.s32.totalorder %s121, %s135
      %p137 = scmp.eq.s32.totalorder %s27, 0
      %p138 = por %p136, %p137
      %s140 = sadd.s32 %s139, 1
      %p143 = scmp.eq.s32.totalorder %s21, 1
      %p144 = scmp.ne.s32.totalorder %s139, %s141
      %p145 = scmp.eq.s32.totalorder %s21, 0
      %p146 = por %p144, %p145
      %p147 = scmp.ne.s32.totalorder %s139, %s141
      %p148 = scmp.eq.s32.totalorder %s26, 1
      %p149 = por %p147, %p148
      %p150 = scmp.ne.s32.totalorder %s141, %s142
      %p151 = scmp.eq.s32.totalorder %s26, 0
      %p152 = por %p150, %p151
      %p153 = scmp.ne.s32.totalorder %s141, %s142
      %p154 = scmp.eq.s32.totalorder %s27, 1
      %p155 = por %p153, %p154
      %p157 = scmp.ne.s32.totalorder %s142, %s156
      %p158 = scmp.eq.s32.totalorder %s27, 0
      %p159 = por %p157, %p158
      %s161 = sadd.s32 %s160, 1
      %p164 = scmp.eq.s32.totalorder %s21, 1
      %p165 = scmp.ne.s32.totalorder %s160, %s162
      %p166 = scmp.eq.s32.totalorder %s21, 0
      %p167 = por %p165, %p166
      %p168 = scmp.ne.s32.totalorder %s160, %s162
      %p169 = scmp.eq.s32.totalorder %s26, 1
      %p170 = por %p168, %p169
      %p171 = scmp.ne.s32.totalorder %s162, %s163
      %p172 = scmp.eq.s32.totalorder %s26, 0
      %p173 = por %p171, %p172
      %p174 = scmp.ne.s32.totalorder %s162, %s163
      %p175 = scmp.eq.s32.totalorder %s27, 1
      %p176 = por %p174, %p175
      %p178 = scmp.ne.s32.totalorder %s163, %s177
      %p179 = scmp.eq.s32.totalorder %s27, 0
      %p180 = por %p178, %p179
      %s181 = ssub.s32 %s21, %s28
      %p182 = scmp.eq.s32.totalorder %s181, 0
      %s184 = sadd.s32 %s183, 1
      %s185 = scalar_select %p182, %s183, %s184
      %p188 = pneg %p182
      %p189 = scmp.eq.s32.totalorder %s21, 1
      %p190 = por %p188, %p189
      %p191 = scmp.ne.s32.totalorder %s183, %s186
      %p192 = scmp.eq.s32.totalorder %s21, 0
      %p193 = por %p191, %p192
      %p194 = scmp.ne.s32.totalorder %s183, %s186
      %p195 = scmp.eq.s32.totalorder %s26, 1
      %p196 = por %p194, %p195
      %p197 = scmp.ne.s32.totalorder %s186, %s187
      %p198 = scmp.eq.s32.totalorder %s26, 0
      %p199 = por %p197, %p198
      %p200 = scmp.ne.s32.totalorder %s186, %s187
      %p201 = scmp.eq.s32.totalorder %s27, 1
      %p202 = por %p200, %p201
      %p204 = scmp.ne.s32.totalorder %s187, %s203
      %p205 = scmp.eq.s32.totalorder %s27, 0
      %p206 = por %p204, %p205
      %p207 = scmp.le.s32.totalorder 1, %s21
      %p208 = scmp.lt.s32.totalorder %s21, 3
      %p209 = pnand %p207, %p208
      %p210 = pneg %p209
      // Predicated region
      $region9: #{tpu_custom_call.1} parent=5 // pred_check
        _
      $region10: #{tpu_custom_call.1} parent=5 // pred_check_branch
        %212 = sbr.rel (%p209) target = $region12
      $region11: #{tpu_custom_call.1} parent=5 // pred_region
        %s213 = ssub.s32 %s21, 1
        // Predicated region
        $region13: #{tpu_custom_call.1} parent=11 // pred_check
          %p214 = pneg %p68
        $region14: #{tpu_custom_call.1} parent=11 // pred_check_branch
          %216 = sbr.rel (%p214) target = $region16
        $region15: #{tpu_custom_call.1} parent=11 // pred_region
          %s218 = ssub.s32 2048, 2048
          %219 = vsyncadd [#allocation6], %s218
          %s220 = sshll.u32 [#allocation5], 4
          %s221 = int_to_ptr.vmem [resolvable:$true] %s220
          %226 = dma.hbm_to_vmem [thread:$0]  %s1, 2048, %s221, [#allocation6], 128, 128, 8
        $region16: #{tpu_custom_call.1} parent=11 // pred_fallthru
          _
        // Predicated region
        $region17: #{tpu_custom_call.1} parent=11 // pred_check
          %p227 = pneg %p89
        $region18: #{tpu_custom_call.1} parent=11 // pred_check_branch
          %229 = sbr.rel (%p227) target = $region20
        $region19: #{tpu_custom_call.1} parent=11 // pred_region
          _
        $region20: #{tpu_custom_call.1} parent=11 // pred_fallthru
          _
        // Predicated region
        $region21: #{tpu_custom_call.1} parent=11 // pred_check
          %p230 = pneg %p110
        $region22: #{tpu_custom_call.1} parent=11 // pred_check_branch
          %232 = sbr.rel (%p230) target = $region24
        $region23: #{tpu_custom_call.1} parent=11 // pred_region
          %s234 = ssub.s32 2048, 2048
          %235 = vsyncadd [#allocation6], %s234
          %s236 = sshll.u32 [#allocation7], 4
          %s237 = int_to_ptr.vmem [resolvable:$true] %s236
          %242 = dma.hbm_to_vmem [thread:$0]  %s3, 2048, %s237, [#allocation6], 128, 128, 8
        $region24: #{tpu_custom_call.1} parent=11 // pred_fallthru
          _
        // Predicated region
        $region25: #{tpu_custom_call.1} parent=11 // pred_check
          %p243 = pneg %p131
        $region26: #{tpu_custom_call.1} parent=11 // pred_check_branch
          %245 = sbr.rel (%p243) target = $region28
        $region27: #{tpu_custom_call.1} parent=11 // pred_region
          _
        $region28: #{tpu_custom_call.1} parent=11 // pred_fallthru
          _
        // Predicated region
        $region29: #{tpu_custom_call.1} parent=11 // pred_check
          %p246 = pneg %p152
        $region30: #{tpu_custom_call.1} parent=11 // pred_check_branch
          %248 = sbr.rel (%p246) target = $region32
        $region31: #{tpu_custom_call.1} parent=11 // pred_region
          %s250 = ssub.s32 2048, 2048
          %251 = vsyncadd [#allocation9], %s250
          %s252 = sshll.u32 [#allocation8], 4
          %s253 = int_to_ptr.vmem [resolvable:$true] %s252
          %258 = dma.hbm_to_vmem [thread:$0]  %s5, 2048, %s253, [#allocation9], 128, 128, 8
        $region32: #{tpu_custom_call.1} parent=11 // pred_fallthru
          _
        // Predicated region
        $region33: #{tpu_custom_call.1} parent=11 // pred_check
          %p259 = pneg %p173
        $region34: #{tpu_custom_call.1} parent=11 // pred_check_branch
          %261 = sbr.rel (%p259) target = $region36
        $region35: #{tpu_custom_call.1} parent=11 // pred_region
          _
        $region36: #{tpu_custom_call.1} parent=11 // pred_fallthru
          _
      $region12: #{tpu_custom_call.1} parent=5 // pred_fallthru
        _
      %p262 = scmp.lt.s32.totalorder %s21, 2
      // Predicated region
      $region37: #{tpu_custom_call.1} parent=5 // pred_check
        %p263 = pneg %p262
      $region38: #{tpu_custom_call.1} parent=5 // pred_check_branch
        %265 = sbr.rel (%p263) target = $region40
      $region39: #{tpu_custom_call.1} parent=5 // pred_region
        // Predicated region
        $region41: #{tpu_custom_call.1} parent=39 // pred_check
          %p266 = pneg %p41
        $region42: #{tpu_custom_call.1} parent=39 // pred_check_branch
          %268 = sbr.rel (%p266) target = $region44
        $region43: #{tpu_custom_call.1} parent=39 // pred_region
          %s269 = sand.u32 %s31, 1
          %s270 = scalar_lea.sflag [#allocation3], %s269
          %s271 = sand.u32 %s31, 1
          %s272 = smul.addr %s271, 32
          %s273 = scalar_lea.vmem [#allocation2], %s272
          %s274 = smul.u32 4, %s21
          %s276 = ssub.s32 512, 512
          %277 = vsyncadd %s270, %s276
          %s278 = smul.addr %s274, 128
          %s279 = scalar_lea.hbm %s0, %s278
          %s280 = sshll.u32 %s273, 4
          %s281 = int_to_ptr.vmem [resolvable:$true] %s280
          %286 = dma.hbm_to_vmem [thread:$0]  %s279, 512, %s281, %s270, 128, 128, 8
        $region44: #{tpu_custom_call.1} parent=39 // pred_fallthru
          _
      $region40: #{tpu_custom_call.1} parent=5 // pred_fallthru
        _
      %p287 = scmp.le.s32.totalorder 1, %s21
      %p288 = scmp.lt.s32.totalorder %s21, 3
      %p289 = pnand %p287, %p288
      %p290 = pneg %p289
      // Predicated region
      $region45: #{tpu_custom_call.1} parent=5 // pred_check
        _
      $region46: #{tpu_custom_call.1} parent=5 // pred_check_branch
        %292 = sbr.rel (%p289) target = $region48
      $region47: #{tpu_custom_call.1} parent=5 // pred_region
        %s293 = ssub.s32 %s21, 1
        %s294 = sand.u32 %s34, 1
        %s295 = scalar_lea.sflag [#allocation3], %s294
        %s296 = sand.u32 %s34, 1
        %s297 = smul.addr %s296, 32
        %s298 = scalar_lea.vmem [#allocation2], %s297
        // Predicated region
        $region49: #{tpu_custom_call.1} parent=47 // pred_check
          %p299 = pneg %p47
        $region50: #{tpu_custom_call.1} parent=47 // pred_check_branch
          %301 = sbr.rel (%p299) target = $region52
        $region51: #{tpu_custom_call.1} parent=47 // pred_region
          %302 = dma.done %s295, 512
        $region52: #{tpu_custom_call.1} parent=47 // pred_fallthru
          _
        // Predicated region
        $region53: #{tpu_custom_call.1} parent=47 // pred_check
          %p303 = pneg %p68
        $region54: #{tpu_custom_call.1} parent=47 // pred_check_branch
          %305 = sbr.rel (%p303) target = $region56
        $region55: #{tpu_custom_call.1} parent=47 // pred_region
          %306 = dma.done [#allocation6], 2048
        $region56: #{tpu_custom_call.1} parent=47 // pred_fallthru
          _
        // Predicated region
        $region57: #{tpu_custom_call.1} parent=47 // pred_check
          %p307 = pneg %p110
        $region58: #{tpu_custom_call.1} parent=47 // pred_check_branch
          %309 = sbr.rel (%p307) target = $region60
        $region59: #{tpu_custom_call.1} parent=47 // pred_region
          %310 = dma.done [#allocation6], 2048
        $region60: #{tpu_custom_call.1} parent=47 // pred_fallthru
          _
        // Predicated region
        $region61: #{tpu_custom_call.1} parent=47 // pred_check
          %p311 = pneg %p152
        $region62: #{tpu_custom_call.1} parent=47 // pred_check_branch
          %313 = sbr.rel (%p311) target = $region64
        $region63: #{tpu_custom_call.1} parent=47 // pred_region
          %314 = dma.done [#allocation9], 2048
        $region64: #{tpu_custom_call.1} parent=47 // pred_fallthru
          _
        %s315 = sand.u32 %s34, 1
        %s316 = scalar_lea.sflag [#allocation3], %s315
        %s317 = sand.u32 %s34, 1
        %s318 = smul.addr %s317, 32
        %s319 = scalar_lea.vmem [#allocation2], %s318
        %p320 = pneg %p47
        %p321 = pneg %p44
        %p322 = pneg %p68
        %p323 = pneg %p65
        %p324 = pneg %p89
        %p325 = pneg %p86
        %p326 = pneg %p110
        %p327 = pneg %p107
        %p328 = pneg %p131
        %p329 = pneg %p128
        %p330 = pneg %p152
        %p331 = pneg %p149
        %p332 = pneg %p173
        %p333 = pneg %p170
        %p334 = pneg %p199
        %p335 = pneg %p196
        %s336 = sand.u32 %s186, 1
        %s337 = scalar_lea.sflag [#allocation4], %s336
        %s338 = sand.u32 %s186, 1
        %s339 = smul.addr %s338, 32
        %s340 = scalar_lea.vmem [#allocation10], %s339
        %s341 = smul.u32 4, %s26
        %s342 = smul.u32 4, %s26
        %v343 = vld [vmem:[%s298] sm:$0xff]
        %v344 = vld [vmem:[%s298 + $0x8] sm:$0xff]
        %v345 = vld [vmem:[%s298 + $0x10] sm:$0xff]
        %v346 = vld [vmem:[%s298 + $0x18] sm:$0xff]
        %v347 = vld [vmem:[#allocation5] sm:$0xff]
        %v348 = vld [vmem:[#allocation5 + $0x8] sm:$0xff]
        %v349 = vld [vmem:[#allocation5 + $0x10] sm:$0xff]
        %v350 = vld [vmem:[#allocation5 + $0x18] sm:$0xff]
        %v351 = vld [vmem:[#allocation5 + $0x20] sm:$0xff]
        %v352 = vld [vmem:[#allocation5 + $0x28] sm:$0xff]
        %v353 = vld [vmem:[#allocation5 + $0x30] sm:$0xff]
        %v354 = vld [vmem:[#allocation5 + $0x38] sm:$0xff]
        %v355 = vld [vmem:[#allocation5 + $0x40] sm:$0xff]
        %v356 = vld [vmem:[#allocation5 + $0x48] sm:$0xff]
        %v357 = vld [vmem:[#allocation5 + $0x50] sm:$0xff]
        %v358 = vld [vmem:[#allocation5 + $0x58] sm:$0xff]
        %v359 = vld [vmem:[#allocation5 + $0x60] sm:$0xff]
        %v360 = vld [vmem:[#allocation5 + $0x68] sm:$0xff]
        %v361 = vld [vmem:[#allocation5 + $0x70] sm:$0xff]
        %v362 = vld [vmem:[#allocation5 + $0x78] sm:$0xff]
        %v363 = vld [vmem:[%s2] sm:$0x1]
        %v365 = vlaneseq
        %v366 = vshrl.u32 %v365, 7
        %v367 = vsub.s32 0, %v366
        %v368 = vrot.slane %v363, %v367
        %370 = vmatprep.subr.mxu0 0.0
        %371 = vmatpush1.msra.mxu0 %v347
        %372 = vmatprep.subr.mxu0 0.0
        %373 = vmatpush1.msra.mxu0 %v348
        %374 = vmatprep.subr.mxu0 0.0
        %375 = vmatpush1.msra.mxu0 %v349
        %376 = vmatprep.subr.mxu0 0.0
        %377 = vmatpush1.msra.mxu0 %v350
        %378 = vmatprep.subr.mxu0 0.0
        %379 = vmatpush1.msra.mxu0 %v351
        %380 = vmatprep.subr.mxu0 0.0
        %381 = vmatpush1.msra.mxu0 %v352
        %382 = vmatprep.subr.mxu0 0.0
        %383 = vmatpush1.msra.mxu0 %v353
        %384 = vmatprep.subr.mxu0 0.0
        %385 = vmatpush1.msra.mxu0 %v354
        %386 = vmatprep.subr.mxu0 0.0
        %387 = vmatpush1.msra.mxu0 %v355
        %388 = vmatprep.subr.mxu0 0.0
        %389 = vmatpush1.msra.mxu0 %v356
        %390 = vmatprep.subr.mxu0 0.0
        %391 = vmatpush1.msra.mxu0 %v357
        %392 = vmatprep.subr.mxu0 0.0
        %393 = vmatpush1.msra.mxu0 %v358
        %394 = vmatprep.subr.mxu0 0.0
        %395 = vmatpush1.msra.mxu0 %v359
        %396 = vmatprep.subr.mxu0 0.0
        %397 = vmatpush1.msra.mxu0 %v360
        %398 = vmatprep.subr.mxu0 0.0
        %399 = vmatpush1.msra.mxu0 %v361
        %400 = vmatprep.subr.mxu0 0.0
        %401 = vmatpush1.msra.mxu0 %v362
        %402 = vmatprep.subr.mxu0 0.0
        %403 = vmatpush1.msra.mxu0 0.0
        %404 = vmatprep.subr.mxu0 0.0
        %405 = vmatpush1.msra.mxu0 0.0
        %406 = vmatprep.subr.mxu0 0.0
        %407 = vmatpush1.msra.mxu0 0.0
        %408 = vmatprep.subr.mxu0 0.0
        %409 = vmatpush1.msra.mxu0 0.0
        %410 = vmatprep.subr.mxu0 0.0
        %411 = vmatpush1.msra.mxu0 0.0
        %412 = vmatprep.subr.mxu0 0.0
        %413 = vmatpush1.msra.mxu0 0.0
        %414 = vmatprep.subr.mxu0 0.0
        %415 = vmatpush1.msra.mxu0 0.0
        %416 = vmatprep.subr.mxu0 0.0
        %417 = vmatpush1.msra.mxu0 0.0
        %418 = vmatprep.subr.mxu0 0.0
        %419 = vmatpush1.msra.mxu0 0.0
        %420 = vmatprep.subr.mxu0 0.0
        %421 = vmatpush1.msra.mxu0 0.0
        %422 = vmatprep.subr.mxu0 0.0
        %423 = vmatpush1.msra.mxu0 0.0
        %424 = vmatprep.subr.mxu0 0.0
        %425 = vmatpush1.msra.mxu0 0.0
        %426 = vmatprep.subr.mxu0 0.0
        %427 = vmatpush1.msra.mxu0 0.0
        %428 = vmatprep.subr.mxu0 0.0
        %429 = vmatpush1.msra.mxu0 0.0
        %430 = vmatprep.subr.mxu0 0.0
        %431 = vmatpush1.msra.mxu0 0.0
        %432 = vmatprep.subr.mxu0 0.0
        %433 = vmatpush1.msra.mxu0 0.0
        %434 = vmatprep.mubr.f32.mxu0 0.0
        %435 = vmatmul.mubr.f32.gmra.mrb[0].mxu0 %v343
        %v436 = vpop.f32.mrb[0].mxu0
        %v437 = vadd.f32 %v368, %v436
        %v438 = vpop.f32.mrb[0].mxu0
        %439 = vmatprep.mubr.f32.mxu0 0.0
        %440 = vmatmul.mubr.f32.gmra.mrb[0].mxu0 %v344
        %v441 = vpop.f32.mrb[0].mxu0
        %v442 = vadd.f32 %v368, %v441
        %v443 = vpop.f32.mrb[0].mxu0
        %444 = vmatprep.mubr.f32.mxu0 0.0
        %445 = vmatmul.mubr.f32.gmra.mrb[0].mxu0 %v345
        %v446 = vpop.f32.mrb[0].mxu0
        %v447 = vadd.f32 %v368, %v446
        %v448 = vpop.f32.mrb[0].mxu0
        %449 = vmatprep.mubr.f32.mxu0 0.0
        %450 = vmatmul.mubr.f32.gmra.mrb[0].mxu0 %v346
        %v451 = vpop.f32.mrb[0].mxu0
        %v452 = vadd.f32 %v368, %v451
        %v453 = vpop.f32.mrb[0].mxu0
        %454 = vdwg.mxu0
        %v455 = vtanh.pop %v437
        %v456 = vtanh.pop %v442
        %v457 = vtanh.pop %v447
        %v458 = vtanh.pop %v452
        %v459 = vld [vmem:[#allocation7] sm:$0xff]
        %v460 = vld [vmem:[#allocation7 + $0x8] sm:$0xff]
        %v461 = vld [vmem:[#allocation7 + $0x10] sm:$0xff]
        %v462 = vld [vmem:[#allocation7 + $0x18] sm:$0xff]
        %v463 = vld [vmem:[#allocation7 + $0x20] sm:$0xff]
        %v464 = vld [vmem:[#allocation7 + $0x28] sm:$0xff]
        %v465 = vld [vmem:[#allocation7 + $0x30] sm:$0xff]
        %v466 = vld [vmem:[#allocation7 + $0x38] sm:$0xff]
        %v467 = vld [vmem:[#allocation7 + $0x40] sm:$0xff]
        %v468 = vld [vmem:[#allocation7 + $0x48] sm:$0xff]
        %v469 = vld [vmem:[#allocation7 + $0x50] sm:$0xff]
        %v470 = vld [vmem:[#allocation7 + $0x58] sm:$0xff]
        %v471 = vld [vmem:[#allocation7 + $0x60] sm:$0xff]
        %v472 = vld [vmem:[#allocation7 + $0x68] sm:$0xff]
        %v473 = vld [vmem:[#allocation7 + $0x70] sm:$0xff]
        %v474 = vld [vmem:[#allocation7 + $0x78] sm:$0xff]
        %v475 = vld [vmem:[%s4] sm:$0x1]
        %v477 = vlaneseq
        %v478 = vshrl.u32 %v477, 7
        %v479 = vsub.s32 0, %v478
        %v480 = vrot.slane %v475, %v479
        %482 = vmatprep.subr.mxu0 0.0
        %483 = vmatpush1.msra.mxu0 %v459
        %484 = vmatprep.subr.mxu0 0.0
        %485 = vmatpush1.msra.mxu0 %v460
        %486 = vmatprep.subr.mxu0 0.0
        %487 = vmatpush1.msra.mxu0 %v461
        %488 = vmatprep.subr.mxu0 0.0
        %489 = vmatpush1.msra.mxu0 %v462
        %490 = vmatprep.subr.mxu0 0.0
        %491 = vmatpush1.msra.mxu0 %v463
        %492 = vmatprep.subr.mxu0 0.0
        %493 = vmatpush1.msra.mxu0 %v464
        %494 = vmatprep.subr.mxu0 0.0
        %495 = vmatpush1.msra.mxu0 %v465
        %496 = vmatprep.subr.mxu0 0.0
        %497 = vmatpush1.msra.mxu0 %v466
        %498 = vmatprep.subr.mxu0 0.0
        %499 = vmatpush1.msra.mxu0 %v467
        %500 = vmatprep.subr.mxu0 0.0
        %501 = vmatpush1.msra.mxu0 %v468
        %502 = vmatprep.subr.mxu0 0.0
        %503 = vmatpush1.msra.mxu0 %v469
        %504 = vmatprep.subr.mxu0 0.0
        %505 = vmatpush1.msra.mxu0 %v470
        %506 = vmatprep.subr.mxu0 0.0
        %507 = vmatpush1.msra.mxu0 %v471
        %508 = vmatprep.subr.mxu0 0.0
        %509 = vmatpush1.msra.mxu0 %v472
        %510 = vmatprep.subr.mxu0 0.0
        %511 = vmatpush1.msra.mxu0 %v473
        %512 = vmatprep.subr.mxu0 0.0
        %513 = vmatpush1.msra.mxu0 %v474
        %514 = vmatprep.subr.mxu0 0.0
        %515 = vmatpush1.msra.mxu0 0.0
        %516 = vmatprep.subr.mxu0 0.0
        %517 = vmatpush1.msra.mxu0 0.0
        %518 = vmatprep.subr.mxu0 0.0
        %519 = vmatpush1.msra.mxu0 0.0
        %520 = vmatprep.subr.mxu0 0.0
        %521 = vmatpush1.msra.mxu0 0.0
        %522 = vmatprep.subr.mxu0 0.0
        %523 = vmatpush1.msra.mxu0 0.0
        %524 = vmatprep.subr.mxu0 0.0
        %525 = vmatpush1.msra.mxu0 0.0
        %526 = vmatprep.subr.mxu0 0.0
        %527 = vmatpush1.msra.mxu0 0.0
        %528 = vmatprep.subr.mxu0 0.0
        %529 = vmatpush1.msra.mxu0 0.0
        %530 = vmatprep.subr.mxu0 0.0
        %531 = vmatpush1.msra.mxu0 0.0
        %532 = vmatprep.subr.mxu0 0.0
        %533 = vmatpush1.msra.mxu0 0.0
        %534 = vmatprep.subr.mxu0 0.0
        %535 = vmatpush1.msra.mxu0 0.0
        %536 = vmatprep.subr.mxu0 0.0
        %537 = vmatpush1.msra.mxu0 0.0
        %538 = vmatprep.subr.mxu0 0.0
        %539 = vmatpush1.msra.mxu0 0.0
        %540 = vmatprep.subr.mxu0 0.0
        %541 = vmatpush1.msra.mxu0 0.0
        %542 = vmatprep.subr.mxu0 0.0
        %543 = vmatpush1.msra.mxu0 0.0
        %544 = vmatprep.subr.mxu0 0.0
        %545 = vmatpush1.msra.mxu0 0.0
        %546 = vmatprep.mubr.f32.mxu0 0.0
        %547 = vmatmul.mubr.f32.gmra.mrb[0].mxu0 %v455
        %v548 = vpop.f32.mrb[0].mxu0
        %v549 = vadd.f32 %v480, %v548
        %v550 = vpop.f32.mrb[0].mxu0
        %551 = vmatprep.mubr.f32.mxu0 0.0
        %552 = vmatmul.mubr.f32.gmra.mrb[0].mxu0 %v456
        %v553 = vpop.f32.mrb[0].mxu0
        %v554 = vadd.f32 %v480, %v553
        %v555 = vpop.f32.mrb[0].mxu0
        %556 = vmatprep.mubr.f32.mxu0 0.0
        %557 = vmatmul.mubr.f32.gmra.mrb[0].mxu0 %v457
        %v558 = vpop.f32.mrb[0].mxu0
        %v559 = vadd.f32 %v480, %v558
        %v560 = vpop.f32.mrb[0].mxu0
        %561 = vmatprep.mubr.f32.mxu0 0.0
        %562 = vmatmul.mubr.f32.gmra.mrb[0].mxu0 %v458
        %v563 = vpop.f32.mrb[0].mxu0
        %v564 = vadd.f32 %v480, %v563
        %v565 = vpop.f32.mrb[0].mxu0
        %566 = vdwg.mxu0
        %v567 = vtanh.pop %v549
        %v568 = vtanh.pop %v554
        %v569 = vtanh.pop %v559
        %v570 = vtanh.pop %v564
        %v571 = vadd.f32 %v455, %v567
        %v572 = vadd.f32 %v456, %v568
        %v573 = vadd.f32 %v457, %v569
        %v574 = vadd.f32 %v458, %v570
        %v575 = vld [vmem:[#allocation8] sm:$0xff]
        %v576 = vld [vmem:[#allocation8 + $0x8] sm:$0xff]
        %v577 = vld [vmem:[#allocation8 + $0x10] sm:$0xff]
        %v578 = vld [vmem:[#allocation8 + $0x18] sm:$0xff]
        %v579 = vld [vmem:[#allocation8 + $0x20] sm:$0xff]
        %v580 = vld [vmem:[#allocation8 + $0x28] sm:$0xff]
        %v581 = vld [vmem:[#allocation8 + $0x30] sm:$0xff]
        %v582 = vld [vmem:[#allocation8 + $0x38] sm:$0xff]
        %v583 = vld [vmem:[#allocation8 + $0x40] sm:$0xff]
        %v584 = vld [vmem:[#allocation8 + $0x48] sm:$0xff]
        %v585 = vld [vmem:[#allocation8 + $0x50] sm:$0xff]
        %v586 = vld [vmem:[#allocation8 + $0x58] sm:$0xff]
        %v587 = vld [vmem:[#allocation8 + $0x60] sm:$0xff]
        %v588 = vld [vmem:[#allocation8 + $0x68] sm:$0xff]
        %v589 = vld [vmem:[#allocation8 + $0x70] sm:$0xff]
        %v590 = vld [vmem:[#allocation8 + $0x78] sm:$0xff]
        %v591 = vld [vmem:[%s6] sm:$0x1]
        %v593 = vlaneseq
        %v594 = vshrl.u32 %v593, 7
        %v595 = vsub.s32 0, %v594
        %v596 = vrot.slane %v591, %v595
        %598 = vmatprep.subr.mxu0 0.0
        %599 = vmatpush1.msra.mxu0 %v575
        %600 = vmatprep.subr.mxu0 0.0
        %601 = vmatpush1.msra.mxu0 %v576
        %602 = vmatprep.subr.mxu0 0.0
        %603 = vmatpush1.msra.mxu0 %v577
        %604 = vmatprep.subr.mxu0 0.0
        %605 = vmatpush1.msra.mxu0 %v578
        %606 = vmatprep.subr.mxu0 0.0
        %607 = vmatpush1.msra.mxu0 %v579
        %608 = vmatprep.subr.mxu0 0.0
        %609 = vmatpush1.msra.mxu0 %v580
        %610 = vmatprep.subr.mxu0 0.0
        %611 = vmatpush1.msra.mxu0 %v581
        %612 = vmatprep.subr.mxu0 0.0
        %613 = vmatpush1.msra.mxu0 %v582
        %614 = vmatprep.subr.mxu0 0.0
        %615 = vmatpush1.msra.mxu0 %v583
        %616 = vmatprep.subr.mxu0 0.0
        %617 = vmatpush1.msra.mxu0 %v584
        %618 = vmatprep.subr.mxu0 0.0
        %619 = vmatpush1.msra.mxu0 %v585
        %620 = vmatprep.subr.mxu0 0.0
        %621 = vmatpush1.msra.mxu0 %v586
        %622 = vmatprep.subr.mxu0 0.0
        %623 = vmatpush1.msra.mxu0 %v587
        %624 = vmatprep.subr.mxu0 0.0
        %625 = vmatpush1.msra.mxu0 %v588
        %626 = vmatprep.subr.mxu0 0.0
        %627 = vmatpush1.msra.mxu0 %v589
        %628 = vmatprep.subr.mxu0 0.0
        %629 = vmatpush1.msra.mxu0 %v590
        %630 = vmatprep.subr.mxu0 0.0
        %631 = vmatpush1.msra.mxu0 0.0
        %632 = vmatprep.subr.mxu0 0.0
        %633 = vmatpush1.msra.mxu0 0.0
        %634 = vmatprep.subr.mxu0 0.0
        %635 = vmatpush1.msra.mxu0 0.0
        %636 = vmatprep.subr.mxu0 0.0
        %637 = vmatpush1.msra.mxu0 0.0
        %638 = vmatprep.subr.mxu0 0.0
        %639 = vmatpush1.msra.mxu0 0.0
        %640 = vmatprep.subr.mxu0 0.0
        %641 = vmatpush1.msra.mxu0 0.0
        %642 = vmatprep.subr.mxu0 0.0
        %643 = vmatpush1.msra.mxu0 0.0
        %644 = vmatprep.subr.mxu0 0.0
        %645 = vmatpush1.msra.mxu0 0.0
        %646 = vmatprep.subr.mxu0 0.0
        %647 = vmatpush1.msra.mxu0 0.0
        %648 = vmatprep.subr.mxu0 0.0
        %649 = vmatpush1.msra.mxu0 0.0
        %650 = vmatprep.subr.mxu0 0.0
        %651 = vmatpush1.msra.mxu0 0.0
        %652 = vmatprep.subr.mxu0 0.0
        %653 = vmatpush1.msra.mxu0 0.0
        %654 = vmatprep.subr.mxu0 0.0
        %655 = vmatpush1.msra.mxu0 0.0
        %656 = vmatprep.subr.mxu0 0.0
        %657 = vmatpush1.msra.mxu0 0.0
        %658 = vmatprep.subr.mxu0 0.0
        %659 = vmatpush1.msra.mxu0 0.0
        %660 = vmatprep.subr.mxu0 0.0
        %661 = vmatpush1.msra.mxu0 0.0
        %662 = vmatprep.mubr.f32.mxu0 0.0
        %663 = vmatmul.mubr.f32.gmra.mrb[0].mxu0 %v571
        %v664 = vpop.f32.mrb[0].mxu0
        %v665 = vadd.f32 %v596, %v664
        %v666 = vpop.f32.mrb[0].mxu0
        %667 = vmatprep.mubr.f32.mxu0 0.0
        %668 = vmatmul.mubr.f32.gmra.mrb[0].mxu0 %v572
        %v669 = vpop.f32.mrb[0].mxu0
        %v670 = vadd.f32 %v596, %v669
        %v671 = vpop.f32.mrb[0].mxu0
        %672 = vmatprep.mubr.f32.mxu0 0.0
        %673 = vmatmul.mubr.f32.gmra.mrb[0].mxu0 %v573
        %v674 = vpop.f32.mrb[0].mxu0
        %v675 = vadd.f32 %v596, %v674
        %v676 = vpop.f32.mrb[0].mxu0
        %677 = vmatprep.mubr.f32.mxu0 0.0
        %678 = vmatmul.mubr.f32.gmra.mrb[0].mxu0 %v574
        %v679 = vpop.f32.mrb[0].mxu0
        %v680 = vadd.f32 %v596, %v679
        %v681 = vpop.f32.mrb[0].mxu0
        %682 = vdwg.mxu0
        %683 = vst [vmem:[%s340] sm:$0xff] %v665
        %684 = vst [vmem:[%s340 + $0x8] sm:$0xff] %v670
        %685 = vst [vmem:[%s340 + $0x10] sm:$0xff] %v675
        %686 = vst [vmem:[%s340 + $0x18] sm:$0xff] %v680
        %s687 = sand.u32 %s186, 1
        %s688 = scalar_lea.sflag [#allocation4], %s687
        %s689 = sand.u32 %s186, 1
        %s690 = smul.addr %s689, 32
        %s691 = scalar_lea.vmem [#allocation10], %s690
        // Predicated region
        $region65: #{tpu_custom_call.1} parent=47 // pred_check
          %p692 = pneg %p196
        $region66: #{tpu_custom_call.1} parent=47 // pred_check_branch
          %694 = sbr.rel (%p692) target = $region68
        $region67: #{tpu_custom_call.1} parent=47 // pred_region
          %s695 = smul.u32 4, %s26
          %s697 = ssub.s32 512, 512
          %698 = vsyncadd %s688, %s697
          %s699 = smul.addr %s695, 128
          %s700 = scalar_lea.hbm %s7, %s699
          %s701 = sshll.u32 %s691, 4
          %s702 = int_to_ptr.vmem [resolvable:$true] %s701
          %707 = dma.vmem_to_hbm [thread:$0]  %s702, 512, %s700, %s688, 128, 128, 8
        $region68: #{tpu_custom_call.1} parent=47 // pred_fallthru
          _
      $region48: #{tpu_custom_call.1} parent=5 // pred_fallthru
        _
      %p708 = scmp.le.s32.totalorder 2, %s21
      // Predicated region
      $region69: #{tpu_custom_call.1} parent=5 // pred_check
        %p709 = pneg %p708
      $region70: #{tpu_custom_call.1} parent=5 // pred_check_branch
        %711 = sbr.rel (%p709) target = $region72
      $region71: #{tpu_custom_call.1} parent=5 // pred_region
        %s712 = ssub.s32 %s21, 2
        // Predicated region
        $region73: #{tpu_custom_call.1} parent=71 // pred_check
          %p713 = pneg %p202
        $region74: #{tpu_custom_call.1} parent=71 // pred_check_branch
          %715 = sbr.rel (%p713) target = $region76
        $region75: #{tpu_custom_call.1} parent=71 // pred_region
          %s716 = sand.u32 %s187, 1
          %s717 = scalar_lea.sflag [#allocation4], %s716
          %s718 = sand.u32 %s187, 1
          %s719 = smul.addr %s718, 32
          %s720 = scalar_lea.vmem [#allocation10], %s719
          %721 = dma.done %s717, 512
        $region76: #{tpu_custom_call.1} parent=71 // pred_fallthru
          _
      $region72: #{tpu_custom_call.1} parent=5 // pred_fallthru
        _
    $region6: #{tpu_custom_call.1} parent=1 // loop_footer
      %s25 = sadd.s32 1, %s21
    $region7: #{tpu_custom_call.1} parent=1 // loop_footer_branch
      %20 = sbr.rel target = $region3
    $region8: #{tpu_custom_call.1} parent=1 // loop_exit
      _
    %722 = vsyncpa [#allocation3], 1
    %s723 = scalar_lea.sflag [#allocation3], 1
    %724 = vsyncpa %s723, 1
    %725 = vsyncpa [#allocation6], 1
    %726 = vsyncpa [#allocation9], 1
    %727 = vsyncpa [#allocation4], 1
    %s728 = scalar_lea.sflag [#allocation4], 1
    %729 = vsyncpa %s728, 1

</llo_original>
